<compile_context>
chip_gen: v7x
topology: tpu7x:2x2x1
jax: 0.10.0
libtpu: 0.0.40
codegen_flags: <defaults>
</compile_context>

<pallas_src>
import jax
import jax.numpy as jnp
from jax.experimental import pallas as pl
from jax.experimental.pallas import tpu as pltpu


def _round_up(x, m):
    return ((x + m - 1) // m) * m


def _sublane_multiple(dtype):
    itemsize = jnp.dtype(dtype).itemsize
    if itemsize >= 4:
        return 8
    if itemsize == 2:
        return 16
    return 32


# ---------------------------------------------------------------------------
# Kernels
# ---------------------------------------------------------------------------
def _linear_kernel_single_k(x_ref, w_ref, b_ref, o_ref):
    """Single K step: dot + bias written straight to the output tile.

    x_ref: (tm, tk)   w_ref: (tk, tn)   b_ref: (1, tn)   o_ref: (tm, tn)
    No VMEM accumulator round trip (frees the vector-store slot).
    """
    o_ref[...] = (
        jnp.dot(x_ref[...], w_ref[...], preferred_element_type=jnp.float32)
        + b_ref[...].astype(jnp.float32)
    ).astype(o_ref.dtype)


def _linear_kernel_multi_k(x_ref, w_ref, b_ref, o_ref, acc_ref):
    """One (i, j, k) grid step of  out = x @ w_packed + bias.

    acc_ref is a (tm, tn) f32 VMEM accumulator resident across the K axis.
    Bias is folded into the k == 0 store (no zero-init pass, no finalize add).
    """
    k = pl.program_id(2)

    prod = jnp.dot(x_ref[...], w_ref[...], preferred_element_type=jnp.float32)

    @pl.when(k == 0)
    def _first():
        acc_ref[...] = prod + b_ref[...].astype(jnp.float32)

    @pl.when(k > 0)
    def _rest():
        acc_ref[...] += prod

    @pl.when(k == pl.num_programs(2) - 1)
    def _finalize():
        o_ref[...] = acc_ref[...].astype(o_ref.dtype)


# ---------------------------------------------------------------------------
# Tile selection
# ---------------------------------------------------------------------------
def _choose_tiles(B, In, Out, x_dtype, w_dtype, out_dtype, budget_bytes):
    xb = jnp.dtype(x_dtype).itemsize
    wb = jnp.dtype(w_dtype).itemsize
    ob = jnp.dtype(out_dtype).itemsize
    sub = _sublane_multiple(x_dtype)

    M0 = _round_up(B, sub)
    K0 = _round_up(In, 128)
    N0 = _round_up(Out, 128)

    # Prefer one M tile covering the whole (padded) batch so the weight is
    # streamed from HBM exactly once; large K tile cuts accumulator RMW and
    # grid-step overhead; N fills the remaining VMEM budget.
    tm = min(M0, 1024)
    tk = min(K0, 2048 if xb <= 2 else 1024)
    tn = min(N0, 2048)

    def need(tm_, tk_, tn_):
        # 2x double buffering on pipelined operands/outputs + single f32 acc.
        return (2 * (tm_ * tk_ * xb + tk_ * tn_ * wb + tm_ * tn_ * ob + tn_ * 4)
                + tm_ * tn_ * 4)

    while need(tm, tk, tn) > budget_bytes:
        if tn > 128:
            tn = max(128, (tn // 2) // 128 * 128)
        elif tk > 128:
            tk = max(128, (tk // 2) // 128 * 128)
        elif tm > sub:
            tm = max(sub, (tm // 2) // sub * sub)
        else:
            break

    # Guarantee >= 2 blocks on the parallel (M, N) sub-grid so both v7x
    # TensorCores get work (no effect on single-core v5e/v6e).
    if pl.cdiv(M0, tm) * pl.cdiv(N0, tn) < 2:
        if N0 // 128 >= 2:
            tn = 128 * pl.cdiv(N0 // 128, 2)
        elif M0 // sub >= 2:
            tm = sub * pl.cdiv(M0 // sub, 2)

    return tm, tk, tn


# ---------------------------------------------------------------------------
# Wrappers
# ---------------------------------------------------------------------------
def pack_linear_params(weight, bias, compute_dtype=None):
    """One-time repack of PyTorch-layout params: (Out, In) weight -> (In, Out).

    Do this at parameter-load time (outside the hot path) so the kernel
    contracts against an MXU-native (K, N) right-hand side and the large
    weight is never re-cast / re-transposed in HBM per call.
    """
    if compute_dtype is not None:
        weight = weight.astype(compute_dtype)
    return weight.T, bias


def linear_forward_packed(x, w_packed, bias, *, out_dtype=None,
                          vmem_budget_bytes=24 * 2**20):
    """out = x @ w_packed + bias  with w_packed of shape (In, Out)."""
    B, In = x.shape
    In_w, Out = w_packed.shape
    assert In == In_w and bias.shape == (Out,)
    out_dtype = out_dtype if out_dtype is not None else x.dtype

    tm, tk, tn = _choose_tiles(B, In, Out, x.dtype, w_packed.dtype, out_dtype,
                               vmem_budget_bytes)
    Mp, Kp, Np = _round_up(B, tm), _round_up(In, tk), _round_up(Out, tn)

    # Pad only the axes that need it. Zero padding of K is mathematically
    # exact; padded M/N rows/cols are sliced off below.
    x_p = x if (Mp == B and Kp == In) else jnp.pad(x, ((0, Mp - B), (0, Kp - In)))
    w_p = (w_packed if (Kp == In and Np == Out)
           else jnp.pad(w_packed, ((0, Kp - In), (0, Np - Out))))
    b_p = (bias if Np == Out else jnp.pad(bias, (0, Np - Out))).reshape(1, Np)

    gm, gn, gk = Mp // tm, Np // tn, Kp // tk

    # Real HBM traffic: x re-read once per N tile, weight once per M tile.
    flops = 2 * Mp * Np * Kp
    bytes_accessed = (gn * x_p.size * x_p.dtype.itemsize
                      + gm * w_p.size * w_p.dtype.itemsize
                      + gm * b_p.size * b_p.dtype.itemsize
                      + Mp * Np * jnp.dtype(out_dtype).itemsize)
    cost = pl.CostEstimate(flops=flops, transcendentals=0,
                           bytes_accessed=bytes_accessed)

    compiler_params = pltpu.CompilerParams(
        dimension_semantics=(("parallel", "parallel", "arbitrary") if gk > 1
                             else ("parallel", "parallel")),
        vmem_limit_bytes=32 * 2**20,
    )

    if gk == 1:
        grid_spec = pltpu.PrefetchScalarGridSpec(
            num_scalar_prefetch=0,
            grid=(gm, gn),
            in_specs=[
                pl.BlockSpec((tm, tk), lambda i, j: (i, 0)),   # x
                pl.BlockSpec((tk, tn), lambda i, j: (0, j)),   # weight (In, Out)
                pl.BlockSpec((1, tn), lambda i, j: (0, j)),    # bias
            ],
            out_specs=pl.BlockSpec((tm, tn), lambda i, j: (i, j)),
        )
        kernel = _linear_kernel_single_k
    else:
        grid_spec = pltpu.PrefetchScalarGridSpec(
            num_scalar_prefetch=0,
            grid=(gm, gn, gk),
            in_specs=[
                pl.BlockSpec((tm, tk), lambda i, j, k: (i, k)),   # x
                pl.BlockSpec((tk, tn), lambda i, j, k: (k, j)),   # weight (In, Out)
                pl.BlockSpec((1, tn), lambda i, j, k: (0, j)),    # bias
            ],
            out_specs=pl.BlockSpec((tm, tn), lambda i, j, k: (i, j)),
            scratch_shapes=[pltpu.VMEM((tm, tn), jnp.float32)],
        )
        kernel = _linear_kernel_multi_k

    out_p = pl.pallas_call(
        kernel,
        out_shape=jax.ShapeDtypeStruct((Mp, Np), out_dtype),
        grid_spec=grid_spec,
        compiler_params=compiler_params,
        cost_estimate=cost,
    )(x_p, w_p, b_p)

    if Mp != B or Np != Out:
        out_p = out_p[:B, :Out]
    return out_p


def linear_forward(x, weight, bias, *, compute_dtype=None, out_dtype=None,
                   vmem_budget_bytes=24 * 2**20):
    """PyTorch Linear.forward semantics: x @ weight.T + bias, weight (Out, In).

    For repeated inference-style use, call pack_linear_params once and reuse
    linear_forward_packed so the weight repack/cast stays out of the hot path.
    Pass compute_dtype=jnp.bfloat16 for the MXU-native fast path (f32 accum).
    """
    out_dtype = out_dtype if out_dtype is not None else x.dtype
    if compute_dtype is not None:
        x = x.astype(compute_dtype)
    w_packed, bias = pack_linear_params(weight, bias, compute_dtype)
    return linear_forward_packed(x, w_packed, bias, out_dtype=out_dtype,
                                 vmem_budget_bytes=vmem_budget_bytes)


if __name__ == "__main__":
    key = jax.random.PRNGKey(0)
    k_x, k_w = jax.random.split(key)

    # Small shapes consistent with the module: batch=8, in=32, out=16.
    B, IN_FEATURES, OUT_FEATURES = 8, 32, 16

    x = jax.random.normal(k_x, (B, IN_FEATURES), dtype=jnp.float32)
    # Deterministic parameter init mirroring the module's __init__:
    #   weight = randn(out, in) * 0.01 ; bias = zeros(out)
    weight = jax.random.normal(
        k_w, (OUT_FEATURES, IN_FEATURES), dtype=jnp.float32) * 0.01
    bias = jnp.zeros((OUT_FEATURES,), dtype=jnp.float32)

    # f32 path: matches PyTorch forward semantics (single-K fast path).
    out = jax.block_until_ready(linear_forward(x, weight, bias))
    ref = x @ weight.T + bias
    assert out.shape == (B, OUT_FEATURES)
    assert jnp.allclose(out, ref, atol=1e-5, rtol=1e-5)

    # bf16-operand / f32-accumulate MXU-native path.
    out_bf16 = jax.block_until_ready(
        linear_forward(x, weight, bias, compute_dtype=jnp.bfloat16))
    ref_bf16 = (x.astype(jnp.bfloat16).astype(jnp.float32)
                @ weight.astype(jnp.bfloat16).astype(jnp.float32).T + bias)
    assert out_bf16.shape == (B, OUT_FEATURES)
    assert out_bf16.dtype == jnp.float32
    assert jnp.allclose(out_bf16, ref_bf16, atol=2e-2, rtol=2e-2)

    # Moderate shape exercising the multi-K accumulator path, the prepacked
    # hot path, and the 2-block parallel sub-grid split.
    B2, IN2, OUT2 = 256, 2048, 512
    x2 = jax.random.normal(k_x, (B2, IN2), dtype=jnp.float32)
    w2 = jax.random.normal(k_w, (OUT2, IN2), dtype=jnp.float32) * 0.01
    b2 = jnp.zeros((OUT2,), dtype=jnp.float32)
    w2_packed, b2_packed = pack_linear_params(w2, b2)
    out2 = jax.block_until_ready(linear_forward_packed(x2, w2_packed, b2_packed))
    ref2 = jnp.matmul(x2, w2.T, precision=jax.lax.Precision.HIGHEST) + b2
    assert out2.shape == (B2, OUT2)
    assert jnp.allclose(out2, ref2, atol=2e-2, rtol=2e-2)

    print("KERNEL_OK")
</pallas_src>

<mosaic_0001>
module attributes {stable_mosaic.version = 11 : i64} {
  func.func @_linear_kernel_single_k(%arg0: i32, %arg1: i32, %arg2: memref<8x128xf32, #tpu.memory_space<vmem>>, %arg3: memref<128x128xf32, #tpu.memory_space<vmem>>, %arg4: memref<1x128xf32, #tpu.memory_space<vmem>>, %arg5: memref<8x128xf32, #tpu.memory_space<vmem>>) attributes {dimension_semantics = [#tpu.dimension_semantics<parallel>, #tpu.dimension_semantics<parallel>], iteration_bounds = array<i64: 1, 1>, scalar_prefetch = 0 : i64, scratch_operands = 0 : i64, tpu.core_type = #tpu.core_type<tc>, window_params = [{transform_indices = @transform_0, window_bounds = array<i64: 8, 128>}, {transform_indices = @transform_1, window_bounds = array<i64: 128, 128>}, {transform_indices = @transform_2, window_bounds = array<i64: 1, 128>}, {transform_indices = @transform_3, window_bounds = array<i64: 8, 128>}]} {
    %c0 = arith.constant 0 : index
    %c0_0 = arith.constant 0 : index
    %0 = vector.load %arg2[%c0, %c0_0] : memref<8x128xf32, #tpu.memory_space<vmem>>, vector<8x128xf32>
    %c0_1 = arith.constant 0 : index
    %c0_2 = arith.constant 0 : index
    %1 = vector.load %arg3[%c0_1, %c0_2] : memref<128x128xf32, #tpu.memory_space<vmem>>, vector<128x128xf32>
    %cst = arith.constant dense<0.000000e+00> : vector<8x128xf32>
    %2 = tpu.matmul %0, %1, %cst {dimension_numbers = #tpu.dot_dimension_numbers<[1], [0], [0], [1], [0, 0, 1, 1], [], []>} : vector<8x128xf32>, vector<128x128xf32>, vector<8x128xf32> -> vector<8x128xf32>
    %c0_3 = arith.constant 0 : index
    %c0_4 = arith.constant 0 : index
    %3 = vector.load %arg4[%c0_3, %c0_4] : memref<1x128xf32, #tpu.memory_space<vmem>>, vector<1x128xf32>
    %4 = vector.broadcast %3 : vector<1x128xf32> to vector<8x128xf32>
    %5 = arith.addf %2, %4 : vector<8x128xf32>
    %c0_5 = arith.constant 0 : index
    %c0_6 = arith.constant 0 : index
    %6 = vector.load %arg5[%c0_5, %c0_6] : memref<8x128xf32, #tpu.memory_space<vmem>>, vector<8x128xf32>
    tpu.vector_store %arg5[%c0_5, %c0_6], %5 {strides = array<i32>} : memref<8x128xf32, #tpu.memory_space<vmem>>, vector<8x128xf32>,
    return
  }
  func.func @transform_0(%arg0: i32, %arg1: i32) -> (i32, i32) {
    %c0_i32 = arith.constant 0 : i32
    %c0_i32_0 = arith.constant 0 : i32
    return %arg0, %c0_i32 : i32, i32
  }
  func.func @transform_1(%arg0: i32, %arg1: i32) -> (i32, i32) {
    %c0_i32 = arith.constant 0 : i32
    %c0_i32_0 = arith.constant 0 : i32
    return %c0_i32, %arg1 : i32, i32
  }
  func.func @transform_2(%arg0: i32, %arg1: i32) -> (i32, i32) {
    %c0_i32 = arith.constant 0 : i32
    %c0_i32_0 = arith.constant 0 : i32
    return %c0_i32, %arg1 : i32, i32
  }
  func.func @transform_3(%arg0: i32, %arg1: i32) -> (i32, i32) {
    %c0_i32 = arith.constant 0 : i32
    return %arg0, %arg1 : i32, i32
  }
}

</mosaic_0001>

<llo_original>
// kernel: tpu_custom_call.1
$region0: #{tpu_custom_call.1}
  #allocation0 [shape = 'u32[]', space=smem, size = 0x4, offset = 0x4, fixed_abs, tag = 'smem constant byte address 0x4 - core index']
  #allocation1 [shape = 'u32[144,128]{1,0:T(1,128)}', space=vmem, size = 0x12000, scoped, tag = 'internal scratch']
  %s0 = inlined_call_operand.hbm [shape: f32[8,128], index: 0, kind: input, shape index: {}]
  %s1 = inlined_call_operand.hbm [shape: f32[128,128], index: 1, kind: input, shape index: {}]
  %s2 = inlined_call_operand.vmem [shape: f32[1,128], index: 2, kind: input, shape index: {}]
  %s3 = inlined_call_operand.hbm [shape: f32[8,128], index: 3, kind: output, shape index: {}]
  %s4 = sld [smem:[#allocation0]]
  $region30: #{tpu_custom_call.1} parent=0
    _
  %s6 = ssub.s32 1, %s4
  %s7 = scalar_select 0, %s6, %s4
  $region1: #{tpu_custom_call.1} parent=0
    #allocation2 [shape = 'u8[4096]{0}', space=vmem, size = 0x1000, scoped, tag = 'input window, operand 0, single buffered']
    #allocation3 [shape = 's32[1]{0}', space=sflag, size = 0x4, scoped, tag = 'scoped memory for tpu_custom_call.1']
    #allocation4 [shape = 's32[1]{0}', space=sflag, size = 0x4, scoped, tag = 'scoped memory for tpu_custom_call.1']
    #allocation5 [shape = 'u8[65536]{0}', space=vmem, size = 0x10000, scoped, tag = 'input window, operand 1, single buffered']
    #allocation6 [shape = 's32[1]{0}', space=sflag, size = 0x4, scoped, tag = 'scoped memory for tpu_custom_call.1']
    #allocation7 [shape = 'u8[4096]{0}', space=vmem, size = 0x1000, scoped, tag = 'output window, operand 0, single buffered']
    %8 = vsyncpa [#allocation3], 0
    %9 = vsyncpa [#allocation6], 0
    %10 = vsyncpa [#allocation4], 0
    // Predicated region
    $region2: #{tpu_custom_call.1} parent=1 // pred_check
      _
    $region3: #{tpu_custom_call.1} parent=1 // pred_check_branch
      %12 = sbr.rel (0) target = $region5
    $region4: #{tpu_custom_call.1} parent=1 // pred_region
      %s14 = ssub.s32 128, 128
      %15 = vsyncadd [#allocation3], %s14
      %s17 = sshll.u32 [#allocation2], 4
      %s18 = int_to_ptr.vmem [resolvable:$true] %s17
      %20 = dma.hbm_to_vmem [thread:$0]  %s0, 128, %s18, [#allocation3]
    $region5: #{tpu_custom_call.1} parent=1 // pred_fallthru
      _
    // Predicated region
    $region6: #{tpu_custom_call.1} parent=1 // pred_check
      _
    $region7: #{tpu_custom_call.1} parent=1 // pred_check_branch
      %22 = sbr.rel (0) target = $region9
    $region8: #{tpu_custom_call.1} parent=1 // pred_region
      %s24 = ssub.s32 2048, 2048
      %25 = vsyncadd [#allocation6], %s24
      %s26 = sshll.u32 [#allocation5], 4
      %s27 = int_to_ptr.vmem [resolvable:$true] %s26
      %32 = dma.hbm_to_vmem [thread:$0]  %s1, 2048, %s27, [#allocation6], 128, 128, 8
    $region9: #{tpu_custom_call.1} parent=1 // pred_fallthru
      _
    // Predicated region
    $region10: #{tpu_custom_call.1} parent=1 // pred_check
      _
    $region11: #{tpu_custom_call.1} parent=1 // pred_check_branch
      %34 = sbr.rel (0) target = $region13
    $region12: #{tpu_custom_call.1} parent=1 // pred_region
      _
    $region13: #{tpu_custom_call.1} parent=1 // pred_fallthru
      _
    // Predicated region
    $region14: #{tpu_custom_call.1} parent=1 // pred_check
      _
    $region15: #{tpu_custom_call.1} parent=1 // pred_check_branch
      %36 = sbr.rel (0) target = $region17
    $region16: #{tpu_custom_call.1} parent=1 // pred_region
      %37 = dma.done [#allocation3], 128
    $region17: #{tpu_custom_call.1} parent=1 // pred_fallthru
      _
    // Predicated region
    $region18: #{tpu_custom_call.1} parent=1 // pred_check
      _
    $region19: #{tpu_custom_call.1} parent=1 // pred_check_branch
      %39 = sbr.rel (0) target = $region21
    $region20: #{tpu_custom_call.1} parent=1 // pred_region
      %40 = dma.done [#allocation6], 2048
    $region21: #{tpu_custom_call.1} parent=1 // pred_fallthru
      _
    %v41 = vld [vmem:[#allocation2] sm:$0xff]
    %v42 = vld [vmem:[#allocation5] sm:$0xff]
    %v43 = vld [vmem:[#allocation5 + $0x8] sm:$0xff]
    %v44 = vld [vmem:[#allocation5 + $0x10] sm:$0xff]
    %v45 = vld [vmem:[#allocation5 + $0x18] sm:$0xff]
    %v46 = vld [vmem:[#allocation5 + $0x20] sm:$0xff]
    %v47 = vld [vmem:[#allocation5 + $0x28] sm:$0xff]
    %v48 = vld [vmem:[#allocation5 + $0x30] sm:$0xff]
    %v49 = vld [vmem:[#allocation5 + $0x38] sm:$0xff]
    %v50 = vld [vmem:[#allocation5 + $0x40] sm:$0xff]
    %v51 = vld [vmem:[#allocation5 + $0x48] sm:$0xff]
    %v52 = vld [vmem:[#allocation5 + $0x50] sm:$0xff]
    %v53 = vld [vmem:[#allocation5 + $0x58] sm:$0xff]
    %v54 = vld [vmem:[#allocation5 + $0x60] sm:$0xff]
    %v55 = vld [vmem:[#allocation5 + $0x68] sm:$0xff]
    %v56 = vld [vmem:[#allocation5 + $0x70] sm:$0xff]
    %v57 = vld [vmem:[#allocation5 + $0x78] sm:$0xff]
    %v58 = vld [vmem:[%s2] sm:$0x1]
    %v60 = vlaneseq
    %v61 = vshrl.u32 %v60, 7
    %v62 = vsub.s32 0, %v61
    %v63 = vrot.slane %v58, %v62
    %65 = vmatprep.subr.mxu0 0.0
    %66 = vmatpush1.msra.mxu0 %v42
    %67 = vmatprep.subr.mxu0 0.0
    %68 = vmatpush1.msra.mxu0 %v43
    %69 = vmatprep.subr.mxu0 0.0
    %70 = vmatpush1.msra.mxu0 %v44
    %71 = vmatprep.subr.mxu0 0.0
    %72 = vmatpush1.msra.mxu0 %v45
    %73 = vmatprep.subr.mxu0 0.0
    %74 = vmatpush1.msra.mxu0 %v46
    %75 = vmatprep.subr.mxu0 0.0
    %76 = vmatpush1.msra.mxu0 %v47
    %77 = vmatprep.subr.mxu0 0.0
    %78 = vmatpush1.msra.mxu0 %v48
    %79 = vmatprep.subr.mxu0 0.0
    %80 = vmatpush1.msra.mxu0 %v49
    %81 = vmatprep.subr.mxu0 0.0
    %82 = vmatpush1.msra.mxu0 %v50
    %83 = vmatprep.subr.mxu0 0.0
    %84 = vmatpush1.msra.mxu0 %v51
    %85 = vmatprep.subr.mxu0 0.0
    %86 = vmatpush1.msra.mxu0 %v52
    %87 = vmatprep.subr.mxu0 0.0
    %88 = vmatpush1.msra.mxu0 %v53
    %89 = vmatprep.subr.mxu0 0.0
    %90 = vmatpush1.msra.mxu0 %v54
    %91 = vmatprep.subr.mxu0 0.0
    %92 = vmatpush1.msra.mxu0 %v55
    %93 = vmatprep.subr.mxu0 0.0
    %94 = vmatpush1.msra.mxu0 %v56
    %95 = vmatprep.subr.mxu0 0.0
    %96 = vmatpush1.msra.mxu0 %v57
    %97 = vmatprep.subr.mxu0 0.0
    %98 = vmatpush1.msra.mxu0 0.0
    %99 = vmatprep.subr.mxu0 0.0
    %100 = vmatpush1.msra.mxu0 0.0
    %101 = vmatprep.subr.mxu0 0.0
    %102 = vmatpush1.msra.mxu0 0.0
    %103 = vmatprep.subr.mxu0 0.0
    %104 = vmatpush1.msra.mxu0 0.0
    %105 = vmatprep.subr.mxu0 0.0
    %106 = vmatpush1.msra.mxu0 0.0
    %107 = vmatprep.subr.mxu0 0.0
    %108 = vmatpush1.msra.mxu0 0.0
    %109 = vmatprep.subr.mxu0 0.0
    %110 = vmatpush1.msra.mxu0 0.0
    %111 = vmatprep.subr.mxu0 0.0
    %112 = vmatpush1.msra.mxu0 0.0
    %113 = vmatprep.subr.mxu0 0.0
    %114 = vmatpush1.msra.mxu0 0.0
    %115 = vmatprep.subr.mxu0 0.0
    %116 = vmatpush1.msra.mxu0 0.0
    %117 = vmatprep.subr.mxu0 0.0
    %118 = vmatpush1.msra.mxu0 0.0
    %119 = vmatprep.subr.mxu0 0.0
    %120 = vmatpush1.msra.mxu0 0.0
    %121 = vmatprep.subr.mxu0 0.0
    %122 = vmatpush1.msra.mxu0 0.0
    %123 = vmatprep.subr.mxu0 0.0
    %124 = vmatpush1.msra.mxu0 0.0
    %125 = vmatprep.subr.mxu0 0.0
    %126 = vmatpush1.msra.mxu0 0.0
    %127 = vmatprep.subr.mxu0 0.0
    %128 = vmatpush1.msra.mxu0 0.0
    %129 = vmatprep.mubr.f32.mxu0 0.0
    %130 = vmatmul.mubr.f32.gmra.mrb[0].mxu0 %v41
    %v131 = vpop.f32.mrb[0].mxu0
    %v132 = vadd.f32 %v63, %v131
    %v133 = vpop.f32.mrb[0].mxu0
    %134 = vdwg.mxu0
    %135 = vst [vmem:[#allocation7] sm:$0xff] %v132
    // Predicated region
    $region22: #{tpu_custom_call.1} parent=1 // pred_check
      _
    $region23: #{tpu_custom_call.1} parent=1 // pred_check_branch
      %137 = sbr.rel (0) target = $region25
    $region24: #{tpu_custom_call.1} parent=1 // pred_region
      %s139 = ssub.s32 128, 128
      %140 = vsyncadd [#allocation4], %s139
      %s142 = sshll.u32 [#allocation7], 4
      %s143 = int_to_ptr.vmem [resolvable:$true] %s142
      %145 = dma.vmem_to_hbm [thread:$0]  %s143, 128, %s3, [#allocation4]
    $region25: #{tpu_custom_call.1} parent=1 // pred_fallthru
      _
    // Predicated region
    $region26: #{tpu_custom_call.1} parent=1 // pred_check
      _
    $region27: #{tpu_custom_call.1} parent=1 // pred_check_branch
      %147 = sbr.rel (0) target = $region29
    $region28: #{tpu_custom_call.1} parent=1 // pred_region
      %148 = dma.done [#allocation4], 128
    $region29: #{tpu_custom_call.1} parent=1 // pred_fallthru
      _
    %149 = vsyncpa [#allocation3], 1
    %150 = vsyncpa [#allocation6], 1
    %151 = vsyncpa [#allocation4], 1

</llo_original>
